<compile_context>
chip_gen: v5e
topology: v5e:2x2
jax: 0.10.0
libtpu: 0.0.40
codegen_flags: <defaults>
</compile_context>

<pallas_src>
import functools

import jax
import jax.numpy as jnp
from jax.experimental import pallas as pl
from jax.experimental.pallas import tpu as pltpu

NEG_SLOPE = 0.2                       # PyG GATConv default leaky_relu slope
MASK_FILL = -1e30                     # additive mask for non-edges (bf16-safe)
VMEM_LIMIT_BYTES = 48 * 1024 * 1024   # > scoped defaults, < v7x's 64 MiB physical


# --------------------------------------------------------------------------- #
# Kernels
# --------------------------------------------------------------------------- #
def _project_kernel(x_ref, waug_ref, h_ref, asrcT_ref, adst_ref, *, hc, heads):
    """Single fused matmul: [h | a_src-scores | a_dst-scores] = x @ W_aug."""
    haug = jnp.dot(x_ref[...], waug_ref[...],
                   preferred_element_type=jnp.float32)      # [N, hc + 2*heads]
    h_ref[...] = haug[:, :hc]                               # [N, heads*C]
    asrcT_ref[...] = haug[:, hc:hc + heads].T               # [heads, N] lane-major
    adst_ref[...] = haug[:, hc + heads:hc + 2 * heads]      # [N, heads]


def _attention_kernel(adjb_ref, h_ref, asrcT_ref, adst_ref, b_ref, out_ref,
                      *, heads, out_ch, final_log_softmax):
    """Masked softmax attention + aggregation for one tile of destination rows."""
    adj_bias = adjb_ref[...].astype(jnp.float32)            # [T, N] 0 / -1e30

    cols = []
    # Static unroll (heads = 8 or 1, tiles are small here).
    # TODO(synk): switch to lax.fori_loop + a [T, heads*C] VMEM scratch if
    # T*N grows to the point where 8 live [T, N] temporaries pressure VMEM.
    for hh in range(heads):
        lo = hh * out_ch
        # e[i, j] = leaky_relu(a_dst.h_i + a_src.h_j) + mask_bias[i, j]
        e = adst_ref[:, hh:hh + 1] + asrcT_ref[hh:hh + 1, :]         # [T, N]
        e = jnp.maximum(e, NEG_SLOPE * e)                            # leaky ReLU
        e = e + adj_bias
        # Exact softmax over incoming edges (full src axis present in the tile).
        e = e - jnp.max(e, axis=1, keepdims=True)
        p = jnp.exp(e)                                               # masked -> 0
        denom = jnp.sum(p, axis=1, keepdims=True)                    # [T, 1]
        agg = jnp.dot(p, h_ref[:, lo:lo + out_ch],
                      preferred_element_type=jnp.float32)            # [T, C]
        cols.append(agg / denom)          # normalize AFTER the matmul (tiny op)

    out = cols[0] if heads == 1 else jnp.concatenate(cols, axis=1)   # [T, heads*C]
    out = out + b_ref[...]                                           # bias, lane-dense

    if final_log_softmax:
        # heads == 1 here; log_softmax over classes (per row -> tile exact).
        z = out - jnp.max(out, axis=1, keepdims=True)
        out = z - jnp.log(jnp.sum(jnp.exp(z), axis=1, keepdims=True))
    else:
        # ELU on the whole concatenated tile.
        out = jnp.where(out > 0, out, jnp.exp(jnp.minimum(out, 0.0)) - 1.0)

    out_ref[...] = out            # single lane-dense store per destination tile


# --------------------------------------------------------------------------- #
# Wrappers
# --------------------------------------------------------------------------- #
def _pick_tile(n, target):
    """Largest multiple of 8 dividing n, <= target, keeping >= 2 grid steps."""
    cap = min(target, n // 2) if n >= 16 else n
    cap = max(8, (cap // 8) * 8)
    t = cap
    while t >= 8:
        if n % t == 0:
            return t
        t -= 8
    return n


def _blockdiag_att(a):
    """[heads, C] per-head attention vector -> block-diagonal [heads*C, heads]."""
    heads, c = a.shape
    eye = jnp.eye(heads, dtype=a.dtype)
    return (a[:, :, None] * eye[:, None, :]).reshape(heads * c, heads)


def _augment_weight(w, a_src, a_dst):
    """W_aug = [W | W@blockdiag(a_src) | W@blockdiag(a_dst)] (host-side, tiny)."""
    return jnp.concatenate(
        [w, w @ _blockdiag_att(a_src), w @ _blockdiag_att(a_dst)], axis=1)


def _gat_project(x, w_aug, heads, hc):
    n = x.shape[0]
    vmem = pl.BlockSpec(memory_space=pltpu.MemorySpace.VMEM)
    kernel = functools.partial(_project_kernel, hc=hc, heads=heads)
    return pl.pallas_call(
        kernel,
        out_shape=(jax.ShapeDtypeStruct((n, hc), jnp.float32),      # h
                   jax.ShapeDtypeStruct((heads, n), jnp.float32),   # a_src scores^T
                   jax.ShapeDtypeStruct((n, heads), jnp.float32)),  # a_dst scores
        in_specs=[vmem, vmem],
        out_specs=(vmem, vmem, vmem),
        compiler_params=pltpu.CompilerParams(vmem_limit_bytes=VMEM_LIMIT_BYTES),
    )(x, w_aug)


def _gat_attention(adj_bias, h, asrcT, adst, bias, *, heads, out_ch, tile,
                   final_log_softmax):
    n = adj_bias.shape[0]
    hc = heads * out_ch
    kernel = functools.partial(_attention_kernel, heads=heads, out_ch=out_ch,
                               final_log_softmax=final_log_softmax)
    cost = pl.CostEstimate(
        flops=int(2 * heads * n * n * out_ch + 8 * heads * n * n),
        transcendentals=int(heads * n * n),
        bytes_accessed=int(adj_bias.size * adj_bias.dtype.itemsize
                           + (h.size + asrcT.size + adst.size + n * hc) * 4),
    )
    return pl.pallas_call(
        kernel,
        out_shape=jax.ShapeDtypeStruct((n, hc), jnp.float32),
        grid=(n // tile,),
        in_specs=[
            pl.BlockSpec((tile, n), lambda i: (i, 0)),       # pre-biased adj tile (bf16)
            pl.BlockSpec((n, hc), lambda i: (0, 0)),         # h: whole (grid-invariant)
            pl.BlockSpec((heads, n), lambda i: (0, 0)),      # a_src scores^T: whole
            pl.BlockSpec((tile, heads), lambda i: (i, 0)),   # a_dst scores: dst-row tile
            pl.BlockSpec((1, hc), lambda i: (0, 0)),         # bias
        ],
        out_specs=pl.BlockSpec((tile, hc), lambda i: (i, 0)),
        compiler_params=pltpu.CompilerParams(
            dimension_semantics=("parallel",),   # dst tiles independent (2 TCs on v7x)
            vmem_limit_bytes=VMEM_LIMIT_BYTES,
        ),
        cost_estimate=cost,
    )(adj_bias, h, asrcT, adst, bias)


def gat_forward(x, adj, params, *, tile_target=512):
    """2-layer GAT forward. adj is dense [dst, src] {0,1} with self-loops."""
    heads1, hid = params["as1"].shape
    num_classes = params["w2"].shape[1]
    n = x.shape[0]
    # Note: on v7x (64 MiB VMEM) use roughly half the v6e/v5e dst-tile target.
    tile = _pick_tile(n, tile_target)

    # Pre-biased adjacency streamed as bf16 (halves the dominant N^2 stream):
    # 0 on edges, -1e30 on non-edges; upcast to f32 inside the kernel.
    adj_bias = jnp.where(adj > 0, 0.0, MASK_FILL).astype(jnp.bfloat16)

    w1_aug = _augment_weight(params["w1"], params["as1"], params["ad1"])
    w2_aug = _augment_weight(params["w2"], params["as2"], params["ad2"])

    # ---- layer 1: GATConv(F -> hid, heads=8, concat=True) + bias + ELU ----
    h1, asrcT1, adst1 = _gat_project(x, w1_aug, heads1, heads1 * hid)
    y1 = _gat_attention(adj_bias, h1, asrcT1, adst1, params["b1"],
                        heads=heads1, out_ch=hid, tile=tile,
                        final_log_softmax=False)

    # ---- layer 2: GATConv(heads*hid -> classes, heads=1) + bias + log_softmax ----
    h2, asrcT2, adst2 = _gat_project(y1, w2_aug, 1, num_classes)
    out = _gat_attention(adj_bias, h2, asrcT2, adst2, params["b2"],
                         heads=1, out_ch=num_classes, tile=tile,
                         final_log_softmax=True)
    return out


# --------------------------------------------------------------------------- #
# Pure-JAX dense reference (f32) for sanity checking
# --------------------------------------------------------------------------- #
def gat_reference(x, adj, params):
    def layer(feat, w, a_s, a_d, heads, c):
        h = jnp.dot(feat, w)
        outs = []
        for hh in range(heads):
            hcol = h[:, hh * c:(hh + 1) * c]
            asrc = jnp.sum(hcol * a_s[hh][None, :], axis=-1, keepdims=True)
            adst = jnp.sum(hcol * a_d[hh][None, :], axis=-1, keepdims=True)
            e = adst + asrc.T
            e = jnp.where(e > 0, e, NEG_SLOPE * e)
            e = jnp.where(adj > 0, e, MASK_FILL)
            e = e - jnp.max(e, axis=1, keepdims=True)
            p = jnp.exp(e) * adj
            alpha = p / jnp.sum(p, axis=1, keepdims=True)
            outs.append(jnp.dot(alpha, hcol))
        return jnp.concatenate(outs, axis=-1)

    heads1, hid = params["as1"].shape
    nc = params["w2"].shape[1]
    h1 = layer(x, params["w1"], params["as1"], params["ad1"], heads1, hid) + params["b1"]
    h1 = jnp.where(h1 > 0, h1, jnp.exp(jnp.minimum(h1, 0.0)) - 1.0)
    h2 = layer(h1, params["w2"], params["as2"], params["ad2"], 1, nc) + params["b2"]
    return jax.nn.log_softmax(h2, axis=1)


def _glorot(key, shape):
    fan_in, fan_out = shape[-2], shape[-1]
    s = (6.0 / (fan_in + fan_out)) ** 0.5
    return jax.random.uniform(key, shape, jnp.float32, -s, s)


if __name__ == "__main__":
    N = 256            # number of nodes
    NUM_FEATURES = 16
    NUM_CLASSES = 4
    HID = 8
    IN_HEAD = 8

    root = jax.random.PRNGKey(0)
    k_x, k_adj, k_w1, k_a1s, k_a1d, k_w2, k_a2s, k_a2d = jax.random.split(root, 8)

    # Node features
    x = jax.random.normal(k_x, (N, NUM_FEATURES), jnp.float32)

    # Random directed graph -> dense adjacency adj[dst, src] + self-loops
    # (edge_index -> dense adjacency densification is done host-side).
    adj = (jax.random.uniform(k_adj, (N, N)) < 0.3).astype(jnp.float32)
    adj = jnp.maximum(adj, jnp.eye(N, dtype=jnp.float32))

    params = {
        # conv1: num_features -> hid, heads=8, concat=True
        "w1": _glorot(k_w1, (NUM_FEATURES, IN_HEAD * HID)),
        "as1": _glorot(k_a1s, (IN_HEAD, HID)),
        "ad1": _glorot(k_a1d, (IN_HEAD, HID)),
        "b1": jnp.zeros((1, IN_HEAD * HID), jnp.float32),
        # conv2: hid*heads -> num_classes, heads=1, concat=False
        "w2": _glorot(k_w2, (IN_HEAD * HID, NUM_CLASSES)),
        "as2": _glorot(k_a2s, (1, NUM_CLASSES)),
        "ad2": _glorot(k_a2d, (1, NUM_CLASSES)),
        "b2": jnp.zeros((1, NUM_CLASSES), jnp.float32),
    }

    # TODO(synk): F.dropout / GATConv internal attention dropout are identity in
    # eval mode (training=False) and are intentionally omitted.
    out = jax.block_until_ready(gat_forward(x, adj, params, tile_target=64))
    ref = jax.block_until_ready(gat_reference(x, adj, params))

    assert out.shape == (N, NUM_CLASSES)
    max_err = float(jnp.max(jnp.abs(out - ref)))
    # All-f32 matmul path -> tight agreement with the f32 reference.
    assert max_err < 1e-2, f"mismatch vs JAX reference (max abs err {max_err})"

    print("KERNEL_OK")
</pallas_src>

<mosaic_0001>
module attributes {stable_mosaic.version = 11 : i64} {
  func.func @_project_kernel(%arg0: memref<256x16xf32, #tpu.memory_space<vmem>>, %arg1: memref<16x80xf32, #tpu.memory_space<vmem>>, %arg2: memref<256x64xf32, #tpu.memory_space<vmem>>, %arg3: memref<8x256xf32, #tpu.memory_space<vmem>>, %arg4: memref<256x8xf32, #tpu.memory_space<vmem>>) attributes {dimension_semantics = [], scalar_prefetch = 0 : i64, scratch_operands = 0 : i64, tpu.core_type = #tpu.core_type<tc>} {
    %c0 = arith.constant 0 : index
    %c0_0 = arith.constant 0 : index
    %0 = vector.load %arg0[%c0, %c0_0] : memref<256x16xf32, #tpu.memory_space<vmem>>, vector<256x16xf32>
    %c0_1 = arith.constant 0 : index
    %c0_2 = arith.constant 0 : index
    %1 = vector.load %arg1[%c0_1, %c0_2] : memref<16x80xf32, #tpu.memory_space<vmem>>, vector<16x80xf32>
    %cst = arith.constant dense<0.000000e+00> : vector<256x80xf32>
    %2 = tpu.matmul %0, %1, %cst {dimension_numbers = #tpu.dot_dimension_numbers<[1], [0], [0], [1], [0, 0, 1, 1], [], []>} : vector<256x16xf32>, vector<16x80xf32>, vector<256x80xf32> -> vector<256x80xf32>
    %3 = vector.extract_strided_slice %2 {offsets = [0, 0], sizes = [256, 64], strides = [1, 1]} : vector<256x80xf32> to vector<256x64xf32>
    %c0_3 = arith.constant 0 : index
    %c0_4 = arith.constant 0 : index
    %4 = vector.load %arg2[%c0_3, %c0_4] : memref<256x64xf32, #tpu.memory_space<vmem>>, vector<256x64xf32>
    tpu.vector_store %arg2[%c0_3, %c0_4], %3 {strides = array<i32>} : memref<256x64xf32, #tpu.memory_space<vmem>>, vector<256x64xf32>,
    %5 = vector.extract_strided_slice %2 {offsets = [0, 64], sizes = [256, 8], strides = [1, 1]} : vector<256x80xf32> to vector<256x8xf32>
    %6 = tpu.transpose %5, [1, 0] : vector<256x8xf32> -> vector<8x256xf32>
    %c0_5 = arith.constant 0 : index
    %c0_6 = arith.constant 0 : index
    %7 = vector.load %arg3[%c0_5, %c0_6] : memref<8x256xf32, #tpu.memory_space<vmem>>, vector<8x256xf32>
    tpu.vector_store %arg3[%c0_5, %c0_6], %6 {strides = array<i32>} : memref<8x256xf32, #tpu.memory_space<vmem>>, vector<8x256xf32>,
    %8 = vector.extract_strided_slice %2 {offsets = [0, 72], sizes = [256, 8], strides = [1, 1]} : vector<256x80xf32> to vector<256x8xf32>
    %c0_7 = arith.constant 0 : index
    %c0_8 = arith.constant 0 : index
    %9 = vector.load %arg4[%c0_7, %c0_8] : memref<256x8xf32, #tpu.memory_space<vmem>>, vector<256x8xf32>
    tpu.vector_store %arg4[%c0_7, %c0_8], %8 {strides = array<i32>} : memref<256x8xf32, #tpu.memory_space<vmem>>, vector<256x8xf32>,
    return
  }
}

</mosaic_0001>

<llo_original>
// kernel: tpu_custom_call.1
$region0: #{tpu_custom_call.1}
  #allocation0 [shape = 'u32[]', space=smem, size = 0x4, offset = 0x4, fixed_abs, tag = 'smem constant byte address 0x4 - core index']
  #allocation1 [shape = 'u32[72,128]{1,0:T(1,128)}', space=vmem, size = 0x9000, scoped, tag = 'internal scratch']
  %s0 = inlined_call_operand.vmem [shape: f32[256,16], index: 0, kind: input, shape index: {}]
  %s1 = inlined_call_operand.vmem [shape: f32[16,80], index: 1, kind: input, shape index: {}]
  %s2 = inlined_call_operand.vmem [shape: f32[256,64], index: 2, kind: output, shape index: {0}]
  %s3 = inlined_call_operand.hbm [shape: f32[8,256], index: 3, kind: output, shape index: {1}]
  %s4 = inlined_call_operand.vmem [shape: f32[256,8], index: 4, kind: output, shape index: {2}]
  %5 = xla_tuple %s2, %s3, %s4
  %s6 = sld [smem:[#allocation0]]
  $region34: #{tpu_custom_call.1} parent=0
    _
  %s8 = ssub.s32 1, %s6
  %s9 = scalar_select 0, %s8, %s6
  $region1: #{tpu_custom_call.1} parent=0
    #allocation2 [shape = 'u8[8192]{0}', space=vmem, size = 0x2000, scoped, tag = 'output window, operand 1, single buffered']
    #allocation3 [shape = 's32[1]{0}', space=sflag, size = 0x4, scoped, tag = 'scoped memory for tpu_custom_call.1']
    %10 = vsyncpa [#allocation3], 0
    // Predicated region
    $region2: #{tpu_custom_call.1} parent=1 // pred_check
      _
    $region3: #{tpu_custom_call.1} parent=1 // pred_check_branch
      %12 = sbr.rel (0) target = $region5
    $region4: #{tpu_custom_call.1} parent=1 // pred_region
      _
    $region5: #{tpu_custom_call.1} parent=1 // pred_fallthru
      _
    // Predicated region
    $region6: #{tpu_custom_call.1} parent=1 // pred_check
      _
    $region7: #{tpu_custom_call.1} parent=1 // pred_check_branch
      %14 = sbr.rel (0) target = $region9
    $region8: #{tpu_custom_call.1} parent=1 // pred_region
      _
    $region9: #{tpu_custom_call.1} parent=1 // pred_fallthru
      _
    %v15 = vld [vmem:[%s0] sm:$0xff]
    %v16 = vld [vmem:[%s0 + $0x8] sm:$0xff]
    %v17 = vld [vmem:[%s0 + $0x10] sm:$0xff]
    %v18 = vld [vmem:[%s0 + $0x18] sm:$0xff]
    %v19 = vld [vmem:[%s0 + $0x20] sm:$0xff]
    %v20 = vld [vmem:[%s0 + $0x28] sm:$0xff]
    %v21 = vld [vmem:[%s0 + $0x30] sm:$0xff]
    %v22 = vld [vmem:[%s0 + $0x38] sm:$0xff]
    %v23 = vld [vmem:[%s0 + $0x40] sm:$0xff]
    %v24 = vld [vmem:[%s0 + $0x48] sm:$0xff]
    %v25 = vld [vmem:[%s0 + $0x50] sm:$0xff]
    %v26 = vld [vmem:[%s0 + $0x58] sm:$0xff]
    %v27 = vld [vmem:[%s0 + $0x60] sm:$0xff]
    %v28 = vld [vmem:[%s0 + $0x68] sm:$0xff]
    %v29 = vld [vmem:[%s0 + $0x70] sm:$0xff]
    %v30 = vld [vmem:[%s0 + $0x78] sm:$0xff]
    %v31 = vld [vmem:[%s0 + $0x80] sm:$0xff]
    %v32 = vld [vmem:[%s0 + $0x88] sm:$0xff]
    %v33 = vld [vmem:[%s0 + $0x90] sm:$0xff]
    %v34 = vld [vmem:[%s0 + $0x98] sm:$0xff]
    %v35 = vld [vmem:[%s0 + $0xa0] sm:$0xff]
    %v36 = vld [vmem:[%s0 + $0xa8] sm:$0xff]
    %v37 = vld [vmem:[%s0 + $0xb0] sm:$0xff]
    %v38 = vld [vmem:[%s0 + $0xb8] sm:$0xff]
    %v39 = vld [vmem:[%s0 + $0xc0] sm:$0xff]
    %v40 = vld [vmem:[%s0 + $0xc8] sm:$0xff]
    %v41 = vld [vmem:[%s0 + $0xd0] sm:$0xff]
    %v42 = vld [vmem:[%s0 + $0xd8] sm:$0xff]
    %v43 = vld [vmem:[%s0 + $0xe0] sm:$0xff]
    %v44 = vld [vmem:[%s0 + $0xe8] sm:$0xff]
    %v45 = vld [vmem:[%s0 + $0xf0] sm:$0xff]
    %v46 = vld [vmem:[%s0 + $0xf8] sm:$0xff]
    %v47 = vld [vmem:[%s1] sm:$0xff]
    %v48 = vld [vmem:[%s1 + $0x8] sm:$0xff]
    %vm49 = vcmask 130048
    %v51 = vsel %vm49, %v15, 0
    %v54 = vsel %vm49, %v16, 0
    %v57 = vsel %vm49, %v17, 0
    %v60 = vsel %vm49, %v18, 0
    %v63 = vsel %vm49, %v19, 0
    %v66 = vsel %vm49, %v20, 0
    %v69 = vsel %vm49, %v21, 0
    %v72 = vsel %vm49, %v22, 0
    %v75 = vsel %vm49, %v23, 0
    %v78 = vsel %vm49, %v24, 0
    %v81 = vsel %vm49, %v25, 0
    %v84 = vsel %vm49, %v26, 0
    %v87 = vsel %vm49, %v27, 0
    %v90 = vsel %vm49, %v28, 0
    %v93 = vsel %vm49, %v29, 0
    %v96 = vsel %vm49, %v30, 0
    %v99 = vsel %vm49, %v31, 0
    %v102 = vsel %vm49, %v32, 0
    %v105 = vsel %vm49, %v33, 0
    %v108 = vsel %vm49, %v34, 0
    %v111 = vsel %vm49, %v35, 0
    %v114 = vsel %vm49, %v36, 0
    %v117 = vsel %vm49, %v37, 0
    %v120 = vsel %vm49, %v38, 0
    %v123 = vsel %vm49, %v39, 0
    %v126 = vsel %vm49, %v40, 0
    %v129 = vsel %vm49, %v41, 0
    %v132 = vsel %vm49, %v42, 0
    %v135 = vsel %vm49, %v43, 0
    %v138 = vsel %vm49, %v44, 0
    %v141 = vsel %vm49, %v45, 0
    %v144 = vsel %vm49, %v46, 0
    %146 = vmatpush.msra.mxu0 0.0
    %147 = vmatpush.msra.mxu0 0.0
    %148 = vmatpush.msra.mxu0 0.0
    %149 = vmatpush.msra.mxu0 0.0
    %150 = vmatpush.msra.mxu0 0.0
    %151 = vmatpush.msra.mxu0 0.0
    %152 = vmatpush.msra.mxu0 0.0
    %153 = vmatpush.msra.mxu0 0.0
    %154 = vmatpush.msra.mxu0 0.0
    %155 = vmatpush.msra.mxu0 0.0
    %156 = vmatpush.msra.mxu0 0.0
    %157 = vmatpush.msra.mxu0 0.0
    %158 = vmatpush.msra.mxu0 0.0
    %159 = vmatpush.msra.mxu0 0.0
    %160 = vmatpush.msra.mxu0 %v48
    %161 = vmatpush.msra.mxu0 %v47
    %162 = vmatmul.f32.gmra.mxu0 %v51
    %v163 = vpop.f32.mrf.mxu0
    %v164 = vadd.f32 0.0, %v163
    %165 = vmatmul.f32.gmra.mxu0 %v54
    %v166 = vpop.f32.mrf.mxu0
    %v167 = vadd.f32 0.0, %v166
    %168 = vmatmul.f32.gmra.mxu0 %v57
    %v169 = vpop.f32.mrf.mxu0
    %v170 = vadd.f32 0.0, %v169
    %171 = vmatmul.f32.gmra.mxu0 %v60
    %v172 = vpop.f32.mrf.mxu0
    %v173 = vadd.f32 0.0, %v172
    %174 = vmatmul.f32.gmra.mxu0 %v63
    %v175 = vpop.f32.mrf.mxu0
    %v176 = vadd.f32 0.0, %v175
    %177 = vmatmul.f32.gmra.mxu0 %v66
    %v178 = vpop.f32.mrf.mxu0
    %v179 = vadd.f32 0.0, %v178
    %180 = vmatmul.f32.gmra.mxu0 %v69
    %v181 = vpop.f32.mrf.mxu0
    %v182 = vadd.f32 0.0, %v181
    %183 = vmatmul.f32.gmra.mxu0 %v72
    %v184 = vpop.f32.mrf.mxu0
    %v185 = vadd.f32 0.0, %v184
    %186 = vmatmul.f32.gmra.mxu0 %v75
    %v187 = vpop.f32.mrf.mxu0
    %v188 = vadd.f32 0.0, %v187
    %189 = vmatmul.f32.gmra.mxu0 %v78
    %v190 = vpop.f32.mrf.mxu0
    %v191 = vadd.f32 0.0, %v190
    %192 = vmatmul.f32.gmra.mxu0 %v81
    %v193 = vpop.f32.mrf.mxu0
    %v194 = vadd.f32 0.0, %v193
    %195 = vmatmul.f32.gmra.mxu0 %v84
    %v196 = vpop.f32.mrf.mxu0
    %v197 = vadd.f32 0.0, %v196
    %198 = vmatmul.f32.gmra.mxu0 %v87
    %v199 = vpop.f32.mrf.mxu0
    %v200 = vadd.f32 0.0, %v199
    %201 = vmatmul.f32.gmra.mxu0 %v90
    %v202 = vpop.f32.mrf.mxu0
    %v203 = vadd.f32 0.0, %v202
    %204 = vmatmul.f32.gmra.mxu0 %v93
    %v205 = vpop.f32.mrf.mxu0
    %v206 = vadd.f32 0.0, %v205
    %207 = vmatmul.f32.gmra.mxu0 %v96
    %v208 = vpop.f32.mrf.mxu0
    %v209 = vadd.f32 0.0, %v208
    %210 = vmatmul.f32.gmra.mxu0 %v99
    %v211 = vpop.f32.mrf.mxu0
    %v212 = vadd.f32 0.0, %v211
    %213 = vmatmul.f32.gmra.mxu0 %v102
    %v214 = vpop.f32.mrf.mxu0
    %v215 = vadd.f32 0.0, %v214
    %216 = vmatmul.f32.gmra.mxu0 %v105
    %v217 = vpop.f32.mrf.mxu0
    %v218 = vadd.f32 0.0, %v217
    %219 = vmatmul.f32.gmra.mxu0 %v108
    %v220 = vpop.f32.mrf.mxu0
    %v221 = vadd.f32 0.0, %v220
    %222 = vmatmul.f32.gmra.mxu0 %v111
    %v223 = vpop.f32.mrf.mxu0
    %v224 = vadd.f32 0.0, %v223
    %225 = vmatmul.f32.gmra.mxu0 %v114
    %v226 = vpop.f32.mrf.mxu0
    %v227 = vadd.f32 0.0, %v226
    %228 = vmatmul.f32.gmra.mxu0 %v117
    %v229 = vpop.f32.mrf.mxu0
    %v230 = vadd.f32 0.0, %v229
    %231 = vmatmul.f32.gmra.mxu0 %v120
    %v232 = vpop.f32.mrf.mxu0
    %v233 = vadd.f32 0.0, %v232
    %234 = vmatmul.f32.gmra.mxu0 %v123
    %v235 = vpop.f32.mrf.mxu0
    %v236 = vadd.f32 0.0, %v235
    %237 = vmatmul.f32.gmra.mxu0 %v126
    %v238 = vpop.f32.mrf.mxu0
    %v239 = vadd.f32 0.0, %v238
    %240 = vmatmul.f32.gmra.mxu0 %v129
    %v241 = vpop.f32.mrf.mxu0
    %v242 = vadd.f32 0.0, %v241
    %243 = vmatmul.f32.gmra.mxu0 %v132
    %v244 = vpop.f32.mrf.mxu0
    %v245 = vadd.f32 0.0, %v244
    %246 = vmatmul.f32.gmra.mxu0 %v135
    %v247 = vpop.f32.mrf.mxu0
    %v248 = vadd.f32 0.0, %v247
    %249 = vmatmul.f32.gmra.mxu0 %v138
    %v250 = vpop.f32.mrf.mxu0
    %v251 = vadd.f32 0.0, %v250
    %252 = vmatmul.f32.gmra.mxu0 %v141
    %v253 = vpop.f32.mrf.mxu0
    %v254 = vadd.f32 0.0, %v253
    %255 = vmatmul.f32.gmra.mxu0 %v144
    %v256 = vpop.f32.mrf.mxu0
    %v257 = vadd.f32 0.0, %v256
    %258 = vdwg.mxu0
    %vm259 = vcmask 523264
    %260 = vst.msk [vmem:[%s2] sm:$0xff] %vm259, %v164
    %261 = vst.msk [vmem:[%s2 + $0x8] sm:$0xff] %vm259, %v167
    %262 = vst.msk [vmem:[%s2 + $0x10] sm:$0xff] %vm259, %v170
    %263 = vst.msk [vmem:[%s2 + $0x18] sm:$0xff] %vm259, %v173
    %264 = vst.msk [vmem:[%s2 + $0x20] sm:$0xff] %vm259, %v176
    %265 = vst.msk [vmem:[%s2 + $0x28] sm:$0xff] %vm259, %v179
    %266 = vst.msk [vmem:[%s2 + $0x30] sm:$0xff] %vm259, %v182
    %267 = vst.msk [vmem:[%s2 + $0x38] sm:$0xff] %vm259, %v185
    %268 = vst.msk [vmem:[%s2 + $0x40] sm:$0xff] %vm259, %v188
    %269 = vst.msk [vmem:[%s2 + $0x48] sm:$0xff] %vm259, %v191
    %270 = vst.msk [vmem:[%s2 + $0x50] sm:$0xff] %vm259, %v194
    %271 = vst.msk [vmem:[%s2 + $0x58] sm:$0xff] %vm259, %v197
    %272 = vst.msk [vmem:[%s2 + $0x60] sm:$0xff] %vm259, %v200
    %273 = vst.msk [vmem:[%s2 + $0x68] sm:$0xff] %vm259, %v203
    %274 = vst.msk [vmem:[%s2 + $0x70] sm:$0xff] %vm259, %v206
    %275 = vst.msk [vmem:[%s2 + $0x78] sm:$0xff] %vm259, %v209
    %276 = vst.msk [vmem:[%s2 + $0x80] sm:$0xff] %vm259, %v212
    %277 = vst.msk [vmem:[%s2 + $0x88] sm:$0xff] %vm259, %v215
    %278 = vst.msk [vmem:[%s2 + $0x90] sm:$0xff] %vm259, %v218
    %279 = vst.msk [vmem:[%s2 + $0x98] sm:$0xff] %vm259, %v221
    %280 = vst.msk [vmem:[%s2 + $0xa0] sm:$0xff] %vm259, %v224
    %281 = vst.msk [vmem:[%s2 + $0xa8] sm:$0xff] %vm259, %v227
    %282 = vst.msk [vmem:[%s2 + $0xb0] sm:$0xff] %vm259, %v230
    %283 = vst.msk [vmem:[%s2 + $0xb8] sm:$0xff] %vm259, %v233
    %284 = vst.msk [vmem:[%s2 + $0xc0] sm:$0xff] %vm259, %v236
    %285 = vst.msk [vmem:[%s2 + $0xc8] sm:$0xff] %vm259, %v239
    %286 = vst.msk [vmem:[%s2 + $0xd0] sm:$0xff] %vm259, %v242
    %287 = vst.msk [vmem:[%s2 + $0xd8] sm:$0xff] %vm259, %v245
    %288 = vst.msk [vmem:[%s2 + $0xe0] sm:$0xff] %vm259, %v248
    %289 = vst.msk [vmem:[%s2 + $0xe8] sm:$0xff] %vm259, %v251
    %290 = vst.msk [vmem:[%s2 + $0xf0] sm:$0xff] %vm259, %v254
    %291 = vst.msk [vmem:[%s2 + $0xf8] sm:$0xff] %vm259, %v257
    %324 = vrot.lane.b32.xlu0 %v164, 64
    %v325 = vpop.permute.xlu0 %324
    %326 = vrot.lane.b32.xlu0 %v167, 64
    %v327 = vpop.permute.xlu0 %326
    %328 = vrot.lane.b32.xlu0 %v170, 64
    %v329 = vpop.permute.xlu0 %328
    %330 = vrot.lane.b32.xlu0 %v173, 64
    %v331 = vpop.permute.xlu0 %330
    %332 = vrot.lane.b32.xlu0 %v176, 64
    %v333 = vpop.permute.xlu0 %332
    %334 = vrot.lane.b32.xlu0 %v179, 64
    %v335 = vpop.permute.xlu0 %334
    %336 = vrot.lane.b32.xlu0 %v182, 64
    %v337 = vpop.permute.xlu0 %336
    %338 = vrot.lane.b32.xlu0 %v185, 64
    %v339 = vpop.permute.xlu0 %338
    %340 = vrot.lane.b32.xlu0 %v188, 64
    %v341 = vpop.permute.xlu0 %340
    %342 = vrot.lane.b32.xlu0 %v191, 64
    %v343 = vpop.permute.xlu0 %342
    %344 = vrot.lane.b32.xlu0 %v194, 64
    %v345 = vpop.permute.xlu0 %344
    %346 = vrot.lane.b32.xlu0 %v197, 64
    %v347 = vpop.permute.xlu0 %346
    %348 = vrot.lane.b32.xlu0 %v200, 64
    %v349 = vpop.permute.xlu0 %348
    %350 = vrot.lane.b32.xlu0 %v203, 64
    %v351 = vpop.permute.xlu0 %350
    %352 = vrot.lane.b32.xlu0 %v206, 64
    %v353 = vpop.permute.xlu0 %352
    %354 = vrot.lane.b32.xlu0 %v209, 64
    %v355 = vpop.permute.xlu0 %354
    %356 = vrot.lane.b32.xlu0 %v212, 64
    %v357 = vpop.permute.xlu0 %356
    %358 = vrot.lane.b32.xlu0 %v215, 64
    %v359 = vpop.permute.xlu0 %358
    %360 = vrot.lane.b32.xlu0 %v218, 64
    %v361 = vpop.permute.xlu0 %360
    %362 = vrot.lane.b32.xlu0 %v221, 64
    %v363 = vpop.permute.xlu0 %362
    %364 = vrot.lane.b32.xlu0 %v224, 64
    %v365 = vpop.permute.xlu0 %364
    %366 = vrot.lane.b32.xlu0 %v227, 64
    %v367 = vpop.permute.xlu0 %366
    %368 = vrot.lane.b32.xlu0 %v230, 64
    %v369 = vpop.permute.xlu0 %368
    %370 = vrot.lane.b32.xlu0 %v233, 64
    %v371 = vpop.permute.xlu0 %370
    %372 = vrot.lane.b32.xlu0 %v236, 64
    %v373 = vpop.permute.xlu0 %372
    %374 = vrot.lane.b32.xlu0 %v239, 64
    %v375 = vpop.permute.xlu0 %374
    %376 = vrot.lane.b32.xlu0 %v242, 64
    %v377 = vpop.permute.xlu0 %376
    %378 = vrot.lane.b32.xlu0 %v245, 64
    %v379 = vpop.permute.xlu0 %378
    %380 = vrot.lane.b32.xlu0 %v248, 64
    %v381 = vpop.permute.xlu0 %380
    %382 = vrot.lane.b32.xlu0 %v251, 64
    %v383 = vpop.permute.xlu0 %382
    %384 = vrot.lane.b32.xlu0 %v254, 64
    %v385 = vpop.permute.xlu0 %384
    %386 = vrot.lane.b32.xlu0 %v257, 64
    %v387 = vpop.permute.xlu0 %386
    %420 = vxpose.xlu0.b32.start [1/16] %v325, 128
    %421 = vxpose.xlu0.b32.cont [2/16] %v327, 128
    %422 = vxpose.xlu0.b32.cont [3/16] %v329, 128
    %423 = vxpose.xlu0.b32.cont [4/16] %v331, 128
    %424 = vxpose.xlu0.b32.cont [5/16] %v333, 128
    %425 = vxpose.xlu0.b32.cont [6/16] %v335, 128
    %426 = vxpose.xlu0.b32.cont [7/16] %v337, 128
    %427 = vxpose.xlu0.b32.cont [8/16] %v339, 128
    %428 = vxpose.xlu0.b32.cont [9/16] %v341, 128
    %429 = vxpose.xlu0.b32.cont [10/16] %v343, 128
    %430 = vxpose.xlu0.b32.cont [11/16] %v345, 128
    %431 = vxpose.xlu0.b32.cont [12/16] %v347, 128
    %432 = vxpose.xlu0.b32.cont [13/16] %v349, 128
    %433 = vxpose.xlu0.b32.cont [14/16] %v351, 128
    %434 = vxpose.xlu0.b32.cont [15/16] %v353, 128
    %435 = vxpose.xlu0.b32.end [16/16] %v355, 128
    %v436 = vpop.trf.xlu0
    %v437 = vpop.trf.xlu0
    %v438 = vpop.trf.xlu0
    %v439 = vpop.trf.xlu0
    %v440 = vpop.trf.xlu0
    %v441 = vpop.trf.xlu0
    %v442 = vpop.trf.xlu0
    %v443 = vpop.trf.xlu0
    %v444 = vpop.trf.xlu0
    %v445 = vpop.trf.xlu0
    %v446 = vpop.trf.xlu0
    %v447 = vpop.trf.xlu0
    %v448 = vpop.trf.xlu0
    %v449 = vpop.trf.xlu0
    %v450 = vpop.trf.xlu0
    %v451 = vpop.trf.xlu0
    %452 = vxpose.xlu0.b32.start [1/16] %v357, 128
    %453 = vxpose.xlu0.b32.cont [2/16] %v359, 128
    %454 = vxpose.xlu0.b32.cont [3/16] %v361, 128
    %455 = vxpose.xlu0.b32.cont [4/16] %v363, 128
    %456 = vxpose.xlu0.b32.cont [5/16] %v365, 128
    %457 = vxpose.xlu0.b32.cont [6/16] %v367, 128
    %458 = vxpose.xlu0.b32.cont [7/16] %v369, 128
    %459 = vxpose.xlu0.b32.cont [8/16] %v371, 128
    %460 = vxpose.xlu0.b32.cont [9/16] %v373, 128
    %461 = vxpose.xlu0.b32.cont [10/16] %v375, 128
    %462 = vxpose.xlu0.b32.cont [11/16] %v377, 128
    %463 = vxpose.xlu0.b32.cont [12/16] %v379, 128
    %464 = vxpose.xlu0.b32.cont [13/16] %v381, 128
    %465 = vxpose.xlu0.b32.cont [14/16] %v383, 128
    %466 = vxpose.xlu0.b32.cont [15/16] %v385, 128
    %467 = vxpose.xlu0.b32.end [16/16] %v387, 128
    %v468 = vpop.trf.xlu0
    %v469 = vpop.trf.xlu0
    %v470 = vpop.trf.xlu0
    %v471 = vpop.trf.xlu0
    %v472 = vpop.trf.xlu0
    %v473 = vpop.trf.xlu0
    %v474 = vpop.trf.xlu0
    %v475 = vpop.trf.xlu0
    %v476 = vpop.trf.xlu0
    %v477 = vpop.trf.xlu0
    %v478 = vpop.trf.xlu0
    %v479 = vpop.trf.xlu0
    %v480 = vpop.trf.xlu0
    %v481 = vpop.trf.xlu0
    %v482 = vpop.trf.xlu0
    %v483 = vpop.trf.xlu0
    %484 = vst [vmem:[#allocation2] sm:$0xff] %v436
    %485 = vst [vmem:[#allocation2 + $0x8] sm:$0xff] %v468
    %486 = vrot.lane.b32.xlu0 %v164, 56
    %v487 = vpop.permute.xlu0 %486
    %488 = vrot.lane.b32.xlu0 %v167, 56
    %v489 = vpop.permute.xlu0 %488
    %490 = vrot.lane.b32.xlu0 %v170, 56
    %v491 = vpop.permute.xlu0 %490
    %492 = vrot.lane.b32.xlu0 %v173, 56
    %v493 = vpop.permute.xlu0 %492
    %494 = vrot.lane.b32.xlu0 %v176, 56
    %v495 = vpop.permute.xlu0 %494
    %496 = vrot.lane.b32.xlu0 %v179, 56
    %v497 = vpop.permute.xlu0 %496
    %498 = vrot.lane.b32.xlu0 %v182, 56
    %v499 = vpop.permute.xlu0 %498
    %500 = vrot.lane.b32.xlu0 %v185, 56
    %v501 = vpop.permute.xlu0 %500
    %502 = vrot.lane.b32.xlu0 %v188, 56
    %v503 = vpop.permute.xlu0 %502
    %504 = vrot.lane.b32.xlu0 %v191, 56
    %v505 = vpop.permute.xlu0 %504
    %506 = vrot.lane.b32.xlu0 %v194, 56
    %v507 = vpop.permute.xlu0 %506
    %508 = vrot.lane.b32.xlu0 %v197, 56
    %v509 = vpop.permute.xlu0 %508
    %510 = vrot.lane.b32.xlu0 %v200, 56
    %v511 = vpop.permute.xlu0 %510
    %512 = vrot.lane.b32.xlu0 %v203, 56
    %v513 = vpop.permute.xlu0 %512
    %514 = vrot.lane.b32.xlu0 %v206, 56
    %v515 = vpop.permute.xlu0 %514
    %516 = vrot.lane.b32.xlu0 %v209, 56
    %v517 = vpop.permute.xlu0 %516
    %518 = vrot.lane.b32.xlu0 %v212, 56
    %v519 = vpop.permute.xlu0 %518
    %520 = vrot.lane.b32.xlu0 %v215, 56
    %v521 = vpop.permute.xlu0 %520
    %522 = vrot.lane.b32.xlu0 %v218, 56
    %v523 = vpop.permute.xlu0 %522
    %524 = vrot.lane.b32.xlu0 %v221, 56
    %v525 = vpop.permute.xlu0 %524
    %526 = vrot.lane.b32.xlu0 %v224, 56
    %v527 = vpop.permute.xlu0 %526
    %528 = vrot.lane.b32.xlu0 %v227, 56
    %v529 = vpop.permute.xlu0 %528
    %530 = vrot.lane.b32.xlu0 %v230, 56
    %v531 = vpop.permute.xlu0 %530
    %532 = vrot.lane.b32.xlu0 %v233, 56
    %v533 = vpop.permute.xlu0 %532
    %534 = vrot.lane.b32.xlu0 %v236, 56
    %v535 = vpop.permute.xlu0 %534
    %536 = vrot.lane.b32.xlu0 %v239, 56
    %v537 = vpop.permute.xlu0 %536
    %538 = vrot.lane.b32.xlu0 %v242, 56
    %v539 = vpop.permute.xlu0 %538
    %540 = vrot.lane.b32.xlu0 %v245, 56
    %v541 = vpop.permute.xlu0 %540
    %542 = vrot.lane.b32.xlu0 %v248, 56
    %v543 = vpop.permute.xlu0 %542
    %544 = vrot.lane.b32.xlu0 %v251, 56
    %v545 = vpop.permute.xlu0 %544
    %546 = vrot.lane.b32.xlu0 %v254, 56
    %v547 = vpop.permute.xlu0 %546
    %548 = vrot.lane.b32.xlu0 %v257, 56
    %v549 = vpop.permute.xlu0 %548
    %vm582 = vcmask 64512
    %583 = vst.msk [vmem:[%s4] sm:$0xff] %vm582, %v487
    %584 = vst.msk [vmem:[%s4 + $0x8] sm:$0xff] %vm582, %v489
    %585 = vst.msk [vmem:[%s4 + $0x10] sm:$0xff] %vm582, %v491
    %586 = vst.msk [vmem:[%s4 + $0x18] sm:$0xff] %vm582, %v493
    %587 = vst.msk [vmem:[%s4 + $0x20] sm:$0xff] %vm582, %v495
    %588 = vst.msk [vmem:[%s4 + $0x28] sm:$0xff] %vm582, %v497
    %589 = vst.msk [vmem:[%s4 + $0x30] sm:$0xff] %vm582, %v499
    %590 = vst.msk [vmem:[%s4 + $0x38] sm:$0xff] %vm582, %v501
    %591 = vst.msk [vmem:[%s4 + $0x40] sm:$0xff] %vm582, %v503
    %592 = vst.msk [vmem:[%s4 + $0x48] sm:$0xff] %vm582, %v505
    %593 = vst.msk [vmem:[%s4 + $0x50] sm:$0xff] %vm582, %v507
    %594 = vst.msk [vmem:[%s4 + $0x58] sm:$0xff] %vm582, %v509
    %595 = vst.msk [vmem:[%s4 + $0x60] sm:$0xff] %vm582, %v511
    %596 = vst.msk [vmem:[%s4 + $0x68] sm:$0xff] %vm582, %v513
    %597 = vst.msk [vmem:[%s4 + $0x70] sm:$0xff] %vm582, %v515
    %598 = vst.msk [vmem:[%s4 + $0x78] sm:$0xff] %vm582, %v517
    %599 = vst.msk [vmem:[%s4 + $0x80] sm:$0xff] %vm582, %v519
    %600 = vst.msk [vmem:[%s4 + $0x88] sm:$0xff] %vm582, %v521
    %601 = vst.msk [vmem:[%s4 + $0x90] sm:$0xff] %vm582, %v523
    %602 = vst.msk [vmem:[%s4 + $0x98] sm:$0xff] %vm582, %v525
    %603 = vst.msk [vmem:[%s4 + $0xa0] sm:$0xff] %vm582, %v527
    %604 = vst.msk [vmem:[%s4 + $0xa8] sm:$0xff] %vm582, %v529
    %605 = vst.msk [vmem:[%s4 + $0xb0] sm:$0xff] %vm582, %v531
    %606 = vst.msk [vmem:[%s4 + $0xb8] sm:$0xff] %vm582, %v533
    %607 = vst.msk [vmem:[%s4 + $0xc0] sm:$0xff] %vm582, %v535
    %608 = vst.msk [vmem:[%s4 + $0xc8] sm:$0xff] %vm582, %v537
    %609 = vst.msk [vmem:[%s4 + $0xd0] sm:$0xff] %vm582, %v539
    %610 = vst.msk [vmem:[%s4 + $0xd8] sm:$0xff] %vm582, %v541
    %611 = vst.msk [vmem:[%s4 + $0xe0] sm:$0xff] %vm582, %v543
    %612 = vst.msk [vmem:[%s4 + $0xe8] sm:$0xff] %vm582, %v545
    %613 = vst.msk [vmem:[%s4 + $0xf0] sm:$0xff] %vm582, %v547
    %614 = vst.msk [vmem:[%s4 + $0xf8] sm:$0xff] %vm582, %v549
    // Predicated region
    $region10: #{tpu_custom_call.1} parent=1 // pred_check
      _
    $region11: #{tpu_custom_call.1} parent=1 // pred_check_branch
      %616 = sbr.rel (0) target = $region13
    $region12: #{tpu_custom_call.1} parent=1 // pred_region
      _
    $region13: #{tpu_custom_call.1} parent=1 // pred_fallthru
      _
    // Predicated region
    $region14: #{tpu_custom_call.1} parent=1 // pred_check
      _
    $region15: #{tpu_custom_call.1} parent=1 // pred_check_branch
      %618 = sbr.rel (0) target = $region17
    $region16: #{tpu_custom_call.1} parent=1 // pred_region
      %620 = vsyncadd [#allocation3], 0
      %s622 = sshll.u32 [#allocation2], 4
      %s623 = int_to_ptr.vmem [resolvable:$true] %s622
      %s624 = sshll.u32 %s3, 4
      %s625 = int_to_ptr.hbm [resolvable:$true] %s624
      %627 = dma.vmem_to_hbm [thread:$0]  %s623, 256, %s625, [#allocation3]
    $region17: #{tpu_custom_call.1} parent=1 // pred_fallthru
      _
    // Predicated region
    $region18: #{tpu_custom_call.1} parent=1 // pred_check
      _
    $region19: #{tpu_custom_call.1} parent=1 // pred_check_branch
      %629 = sbr.rel (0) target = $region21
    $region20: #{tpu_custom_call.1} parent=1 // pred_region
      _
    $region21: #{tpu_custom_call.1} parent=1 // pred_fallthru
      _
    // Predicated region
    $region22: #{tpu_custom_call.1} parent=1 // pred_check
      _
    $region23: #{tpu_custom_call.1} parent=1 // pred_check_branch
      %631 = sbr.rel (0) target = $region25
    $region24: #{tpu_custom_call.1} parent=1 // pred_region
      _
    $region25: #{tpu_custom_call.1} parent=1 // pred_fallthru
      _
    // Predicated region
    $region26: #{tpu_custom_call.1} parent=1 // pred_check
      _
    $region27: #{tpu_custom_call.1} parent=1 // pred_check_branch
      %633 = sbr.rel (0) target = $region29
    $region28: #{tpu_custom_call.1} parent=1 // pred_region
      %635 = dma.done [#allocation3], 256
    $region29: #{tpu_custom_call.1} parent=1 // pred_fallthru
      _
    // Predicated region
    $region30: #{tpu_custom_call.1} parent=1 // pred_check
      _
    $region31: #{tpu_custom_call.1} parent=1 // pred_check_branch
      %637 = sbr.rel (0) target = $region33
    $region32: #{tpu_custom_call.1} parent=1 // pred_region
      _
    $region33: #{tpu_custom_call.1} parent=1 // pred_fallthru
      _
    %638 = vsyncpa [#allocation3], 1

</llo_original>
